<compile_context>
chip_gen: v7x
topology: tpu7x:2x2x1
jax: 0.10.0
libtpu: 0.0.40
codegen_flags: <defaults>
</compile_context>

<pallas_src>
import functools
import math

import jax
import jax.numpy as jnp
from jax import lax
from jax.experimental import pallas as pl
from jax.experimental.pallas import tpu as pltpu

LANE = 128
SUBLANE = 8


def _round_up(x, m):
    return ((x + m - 1) // m) * m


def _online_softmax_update(q, k, v, m_sc, l_sc, acc_sc, *, col_offset,
                           s_actual, need_mask, compute_dtype):
    """One flash-attention kv-block update of (m, l, acc) scratch."""
    # scores = q @ k^T contracting last dims of both (no (S, D) transpose).
    s = lax.dot_general(q, k, (((1,), (1,)), ((), ())),
                        preferred_element_type=jnp.float32)       # (tq, tkv)
    if need_mask:
        # Mask zero-padded key rows (statically elided when no padding).
        col = col_offset + lax.broadcasted_iota(jnp.int32, s.shape, 1)
        s = jnp.where(col < s_actual, s, -jnp.inf)

    m_new = jnp.maximum(m_sc[...], jnp.max(s, axis=-1, keepdims=True))
    alpha = jnp.exp(m_sc[...] - m_new)
    p = jnp.exp(s - m_new)
    l_sc[...] = alpha * l_sc[...] + jnp.sum(p, axis=-1, keepdims=True)
    acc_sc[...] = alpha * acc_sc[...] + jnp.dot(
        p.astype(compute_dtype), v, preferred_element_type=jnp.float32)
    m_sc[...] = m_new


def _fused_attention_kernel(xq_ref, xkv_ref, wq_ref, wkv_ref, o_ref,
                            q_sc, m_sc, l_sc, acc_sc,
                            *, dp, tkv, s_actual, s_pad, compute_dtype):
    """Single-pass kernel: Q and fused [K|V] projections computed in-kernel.

    Used when there is only one q-row block (no redundant KV recompute)."""
    ki = pl.program_id(1)

    @pl.when(ki == 0)
    def _init():
        # Q projection once per q-row block (scale folded into W_q).
        q_sc[...] = jnp.dot(xq_ref[...], wq_ref[...],
                            preferred_element_type=jnp.float32
                            ).astype(q_sc.dtype)
        m_sc[...] = jnp.full(m_sc.shape, -jnp.inf, dtype=m_sc.dtype)
        l_sc[...] = jnp.zeros(l_sc.shape, dtype=l_sc.dtype)
        acc_sc[...] = jnp.zeros(acc_sc.shape, dtype=acc_sc.dtype)

    # Fused [K | V] projection for this kv block: one wide MXU pass.
    kv = jnp.dot(xkv_ref[...], wkv_ref[...],
                 preferred_element_type=jnp.float32)              # (tkv, 2*dp)
    k = kv[:, :dp].astype(compute_dtype)
    v = kv[:, dp:].astype(compute_dtype)

    _online_softmax_update(q_sc[...], k, v, m_sc, l_sc, acc_sc,
                           col_offset=ki * tkv, s_actual=s_actual,
                           need_mask=(s_pad != s_actual),
                           compute_dtype=compute_dtype)

    @pl.when(ki == pl.num_programs(1) - 1)
    def _finalize():
        # Deferred softmax normalization on the (tq, dp) output block.
        o_ref[...] = (acc_sc[...] * pl.reciprocal(l_sc[...])
                      ).astype(o_ref.dtype)


def _kv_projection_kernel(x_ref, wkv_ref, kv_ref):
    """Pre-pass: fused [K | V] projection, computed once per kv row block."""
    kv_ref[...] = jnp.dot(x_ref[...], wkv_ref[...],
                          preferred_element_type=jnp.float32
                          ).astype(kv_ref.dtype)


def _flash_attention_kernel(xq_ref, kv_ref, wq_ref, o_ref,
                            q_sc, m_sc, l_sc, acc_sc,
                            *, dp, tkv, s_actual, s_pad, compute_dtype):
    """Two-pass kernel: consumes precomputed [K|V]; Q projected at ki == 0."""
    ki = pl.program_id(1)

    @pl.when(ki == 0)
    def _init():
        q_sc[...] = jnp.dot(xq_ref[...], wq_ref[...],
                            preferred_element_type=jnp.float32
                            ).astype(q_sc.dtype)
        m_sc[...] = jnp.full(m_sc.shape, -jnp.inf, dtype=m_sc.dtype)
        l_sc[...] = jnp.zeros(l_sc.shape, dtype=l_sc.dtype)
        acc_sc[...] = jnp.zeros(acc_sc.shape, dtype=acc_sc.dtype)

    k = kv_ref[:, :dp]
    v = kv_ref[:, dp:]

    _online_softmax_update(q_sc[...], k, v, m_sc, l_sc, acc_sc,
                           col_offset=ki * tkv, s_actual=s_actual,
                           need_mask=(s_pad != s_actual),
                           compute_dtype=compute_dtype)

    @pl.when(ki == pl.num_programs(1) - 1)
    def _finalize():
        o_ref[...] = (acc_sc[...] * pl.reciprocal(l_sc[...])
                      ).astype(o_ref.dtype)


def self_attention(x, wq, wk, wv, *, block_q=256, block_kv=256, mxu_dtype=None):
    """SelfAttention forward.

    x:           (S, D) token encodings (row_dim=0, col_dim=1).
    wq/wk/wv:    PyTorch nn.Linear(bias=False) weights, (out_features, in_features).
    mxu_dtype:   optional dtype (e.g. jnp.bfloat16) for MXU inputs; softmax math
                 and accumulation stay in f32.
    """
    S, D = x.shape
    assert wq.shape == (D, D) and wk.shape == (D, D) and wv.shape == (D, D), \
        "SelfAttention uses square d_model x d_model projections"
    out_dtype = x.dtype
    compute_dtype = mxu_dtype if mxu_dtype is not None else x.dtype

    # ---- host-side layout plumbing (free for XLA) -------------------------
    scale = 1.0 / math.sqrt(wk.shape[0])              # sqrt(k.size(col_dim))
    wq_t = (wq.astype(jnp.float32) * jnp.float32(scale)).T   # (in, out), scaled
    wk_t = wk.T
    wv_t = wv.T

    dp = _round_up(max(D, LANE), LANE)                # lane-dense feature dim
    if S <= max(block_q, block_kv):
        s_pad = _round_up(S, SUBLANE)
        tq = tkv = s_pad
    else:
        tq, tkv = block_q, block_kv
        s_pad = _round_up(S, math.lcm(tq, tkv))

    def pad2(a, rows, cols):
        r, c = a.shape
        if r == rows and c == cols:
            return a
        return jnp.pad(a, ((0, rows - r), (0, cols - c)))

    x_p = pad2(x, s_pad, dp).astype(compute_dtype)
    wq_p = pad2(wq_t, dp, dp).astype(compute_dtype)
    wkv_p = jnp.concatenate(
        [pad2(wk_t, dp, dp), pad2(wv_t, dp, dp)], axis=1
    ).astype(compute_dtype)                            # (dp, 2*dp)

    n_q, n_kv = s_pad // tq, s_pad // tkv
    grid = (n_q, n_kv)

    scratch = [
        pltpu.VMEM((tq, dp), compute_dtype),   # Q block
        pltpu.VMEM((tq, 1), jnp.float32),      # running max m
        pltpu.VMEM((tq, 1), jnp.float32),      # running denom l
        pltpu.VMEM((tq, dp), jnp.float32),     # output accumulator
    ]
    common = dict(dp=dp, tkv=tkv, s_actual=S, s_pad=s_pad,
                  compute_dtype=compute_dtype)

    if n_q == 1:
        # Single q block -> fused projections in-kernel (no redundancy,
        # no extra HBM round trip).
        kernel = functools.partial(_fused_attention_kernel, **common)
        cost = pl.CostEstimate(
            flops=2 * s_pad * dp * 3 * dp + 4 * s_pad * s_pad * dp,
            transcendentals=s_pad * s_pad,
            bytes_accessed=4 * (2 * s_pad * dp + 3 * dp * dp + s_pad * dp))
        out = pl.pallas_call(
            kernel,
            out_shape=jax.ShapeDtypeStruct((s_pad, dp), out_dtype),
            grid=grid,
            in_specs=[
                pl.BlockSpec((tq, dp), lambda qi, ki: (qi, 0)),     # x rows (Q)
                pl.BlockSpec((tkv, dp), lambda qi, ki: (ki, 0)),    # x rows (K/V)
                pl.BlockSpec((dp, dp), lambda qi, ki: (0, 0)),      # W_q^T (scaled)
                pl.BlockSpec((dp, 2 * dp), lambda qi, ki: (0, 0)),  # [W_k^T | W_v^T]
            ],
            out_specs=pl.BlockSpec((tq, dp), lambda qi, ki: (qi, 0)),
            scratch_shapes=scratch,
            compiler_params=pltpu.CompilerParams(
                dimension_semantics=("parallel", "arbitrary")),
            cost_estimate=cost,
        )(x_p, x_p, wq_p, wkv_p)
    else:
        # Pass 1: fused [K|V] projection, once over the sequence (avoids
        # recomputing it for every q block in the attention grid).
        kv_proj = pl.pallas_call(
            _kv_projection_kernel,
            out_shape=jax.ShapeDtypeStruct((s_pad, 2 * dp), compute_dtype),
            grid=(n_kv,),
            in_specs=[
                pl.BlockSpec((tkv, dp), lambda i: (i, 0)),
                pl.BlockSpec((dp, 2 * dp), lambda i: (0, 0)),
            ],
            out_specs=pl.BlockSpec((tkv, 2 * dp), lambda i: (i, 0)),
            compiler_params=pltpu.CompilerParams(
                dimension_semantics=("parallel",)),
            cost_estimate=pl.CostEstimate(
                flops=2 * s_pad * dp * 2 * dp,
                transcendentals=0,
                bytes_accessed=4 * (s_pad * dp + 2 * dp * dp + 2 * s_pad * dp)),
        )(x_p, wkv_p)

        # Pass 2: flash attention over precomputed K/V blocks.
        kernel = functools.partial(_flash_attention_kernel, **common)
        cost = pl.CostEstimate(
            flops=2 * s_pad * dp * dp + 4 * s_pad * s_pad * dp,
            transcendentals=s_pad * s_pad,
            bytes_accessed=4 * (s_pad * dp + 2 * s_pad * dp + dp * dp
                                + s_pad * dp))
        out = pl.pallas_call(
            kernel,
            out_shape=jax.ShapeDtypeStruct((s_pad, dp), out_dtype),
            grid=grid,
            in_specs=[
                pl.BlockSpec((tq, dp), lambda qi, ki: (qi, 0)),       # x rows (Q)
                pl.BlockSpec((tkv, 2 * dp), lambda qi, ki: (ki, 0)),  # [K | V]
                pl.BlockSpec((dp, dp), lambda qi, ki: (0, 0)),        # W_q^T (scaled)
            ],
            out_specs=pl.BlockSpec((tq, dp), lambda qi, ki: (qi, 0)),
            scratch_shapes=scratch,
            compiler_params=pltpu.CompilerParams(
                dimension_semantics=("parallel", "arbitrary")),
            cost_estimate=cost,
        )(x_p, kv_proj, wq_p)

    return out[:S, :D]


def self_attention_ref(x, wq, wk, wv):
    """Pure-JAX reference mirroring the PyTorch forward exactly."""
    q = x @ wq.T
    k = x @ wk.T
    v = x @ wv.T
    scores = q @ k.T
    scaled = scores / math.sqrt(k.shape[1])
    attn = jax.nn.softmax(scaled, axis=1)
    return attn @ v


def _make_inputs(key, seq, d_model):
    kx, kq, kk, kv = jax.random.split(key, 4)
    x = jax.random.normal(kx, (seq, d_model), dtype=jnp.float32)
    w_scale = 1.0 / math.sqrt(d_model)
    W_q = jax.random.uniform(kq, (d_model, d_model), dtype=jnp.float32,
                             minval=-w_scale, maxval=w_scale)
    W_k = jax.random.uniform(kk, (d_model, d_model), dtype=jnp.float32,
                             minval=-w_scale, maxval=w_scale)
    W_v = jax.random.uniform(kv, (d_model, d_model), dtype=jnp.float32,
                             minval=-w_scale, maxval=w_scale)
    return x, W_q, W_k, W_v


if __name__ == "__main__":
    key = jax.random.PRNGKey(0)

    # --- small shapes consistent with the module's forward: (seq, d_model) ---
    seq, d_model = 8, 32
    x, W_q, W_k, W_v = _make_inputs(key, seq, d_model)
    ref = self_attention_ref(x, W_q, W_k, W_v)

    # f32 MXU inputs (exact path, fused single-block kernel).
    out = jax.block_until_ready(self_attention(x, W_q, W_k, W_v))
    assert out.shape == (seq, d_model)
    assert jnp.allclose(out, ref, atol=1e-4, rtol=1e-4), "f32 mismatch vs reference"

    # bf16 MXU inputs with f32 accumulation (v6e/v7x peak-throughput path).
    out_bf16 = jax.block_until_ready(
        self_attention(x, W_q, W_k, W_v, mxu_dtype=jnp.bfloat16))
    assert jnp.allclose(out_bf16, ref, atol=5e-2, rtol=5e-2), \
        "bf16 mismatch vs reference"

    # --- multi-q-block path (KV-projection pre-pass + flash attention) ------
    # Small masked case (seq padded, multiple blocks).
    x2, W_q2, W_k2, W_v2 = _make_inputs(jax.random.PRNGKey(1), 40, d_model)
    ref2 = self_attention_ref(x2, W_q2, W_k2, W_v2)
    out2 = jax.block_until_ready(
        self_attention(x2, W_q2, W_k2, W_v2, block_q=16, block_kv=16))
    assert jnp.allclose(out2, ref2, atol=1e-4, rtol=1e-4), \
        "f32 multi-block (masked) mismatch vs reference"

    # Default block sizes, unmasked multi-block case.
    x3, W_q3, W_k3, W_v3 = _make_inputs(jax.random.PRNGKey(2), 512, d_model)
    ref3 = self_attention_ref(x3, W_q3, W_k3, W_v3)
    out3 = jax.block_until_ready(self_attention(x3, W_q3, W_k3, W_v3))
    assert jnp.allclose(out3, ref3, atol=1e-4, rtol=1e-4), \
        "f32 multi-block mismatch vs reference"

    print("KERNEL_OK")
</pallas_src>

<mosaic_0001>
module attributes {stable_mosaic.version = 11 : i64} {
  func.func @_fused_attention_kernel(%arg0: i32, %arg1: i32, %arg2: memref<8x128xf32, #tpu.memory_space<vmem>>, %arg3: memref<8x128xf32, #tpu.memory_space<vmem>>, %arg4: memref<128x128xf32, #tpu.memory_space<vmem>>, %arg5: memref<128x256xf32, #tpu.memory_space<vmem>>, %arg6: memref<8x128xf32, #tpu.memory_space<vmem>>, %arg7: memref<8x128xf32, #tpu.memory_space<vmem>>, %arg8: memref<8x1xf32, #tpu.memory_space<vmem>>, %arg9: memref<8x1xf32, #tpu.memory_space<vmem>>, %arg10: memref<8x128xf32, #tpu.memory_space<vmem>>) attributes {dimension_semantics = [#tpu.dimension_semantics<parallel>, #tpu.dimension_semantics<arbitrary>], iteration_bounds = array<i64: 1, 1>, scalar_prefetch = 0 : i64, scratch_operands = 4 : i64, tpu.core_type = #tpu.core_type<tc>, window_params = [{transform_indices = @transform_0, window_bounds = array<i64: 8, 128>}, {transform_indices = @transform_1, window_bounds = array<i64: 8, 128>}, {pipeline_mode = #tpu.pipeline_mode<synchronous>, transform_indices = @transform_2, window_bounds = array<i64: 128, 128>}, {pipeline_mode = #tpu.pipeline_mode<synchronous>, transform_indices = @transform_3, window_bounds = array<i64: 128, 256>}, {transform_indices = @transform_4, window_bounds = array<i64: 8, 128>}]} {
    %c0_i32 = arith.constant 0 : i32
    %0 = arith.cmpi eq, %arg1, %c0_i32 : i32
    %1 = arith.extui %0 : i1 to i32
    %c0_i32_0 = arith.constant 0 : i32
    %2 = arith.cmpi ne, %1, %c0_i32_0 : i32
    scf.if %2 {
      %c0_26 = arith.constant 0 : index
      %c0_27 = arith.constant 0 : index
      %36 = vector.load %arg2[%c0_26, %c0_27] : memref<8x128xf32, #tpu.memory_space<vmem>>, vector<8x128xf32>
      %c0_28 = arith.constant 0 : index
      %c0_29 = arith.constant 0 : index
      %37 = vector.load %arg4[%c0_28, %c0_29] : memref<128x128xf32, #tpu.memory_space<vmem>>, vector<128x128xf32>
      %cst_30 = arith.constant dense<0.000000e+00> : vector<8x128xf32>
      %38 = tpu.matmul %36, %37, %cst_30 {dimension_numbers = #tpu.dot_dimension_numbers<[1], [0], [0], [1], [0, 0, 1, 1], [], []>} : vector<8x128xf32>, vector<128x128xf32>, vector<8x128xf32> -> vector<8x128xf32>
      %c0_31 = arith.constant 0 : index
      %c0_32 = arith.constant 0 : index
      %39 = vector.load %arg7[%c0_31, %c0_32] : memref<8x128xf32, #tpu.memory_space<vmem>>, vector<8x128xf32>
      tpu.vector_store %arg7[%c0_31, %c0_32], %38 {strides = array<i32>} : memref<8x128xf32, #tpu.memory_space<vmem>>, vector<8x128xf32>,
      %cst_33 = arith.constant 0xFF800000 : f32
      %40 = vector.broadcast %cst_33 : f32 to vector<8x1xf32>
      %c0_34 = arith.constant 0 : index
      %c0_35 = arith.constant 0 : index
      %41 = vector.load %arg8[%c0_34, %c0_35] : memref<8x1xf32, #tpu.memory_space<vmem>>, vector<8x1xf32>
      tpu.vector_store %arg8[%c0_34, %c0_35], %40 {strides = array<i32>} : memref<8x1xf32, #tpu.memory_space<vmem>>, vector<8x1xf32>,
      %cst_36 = arith.constant 0.000000e+00 : f32
      %42 = vector.broadcast %cst_36 : f32 to vector<8x1xf32>
      %c0_37 = arith.constant 0 : index
      %c0_38 = arith.constant 0 : index
      %43 = vector.load %arg9[%c0_37, %c0_38] : memref<8x1xf32, #tpu.memory_space<vmem>>, vector<8x1xf32>
      tpu.vector_store %arg9[%c0_37, %c0_38], %42 {strides = array<i32>} : memref<8x1xf32, #tpu.memory_space<vmem>>, vector<8x1xf32>,
      %cst_39 = arith.constant 0.000000e+00 : f32
      %44 = vector.broadcast %cst_39 : f32 to vector<8x128xf32>
      %c0_40 = arith.constant 0 : index
      %c0_41 = arith.constant 0 : index
      %45 = vector.load %arg10[%c0_40, %c0_41] : memref<8x128xf32, #tpu.memory_space<vmem>>, vector<8x128xf32>
      tpu.vector_store %arg10[%c0_40, %c0_41], %44 {strides = array<i32>} : memref<8x128xf32, #tpu.memory_space<vmem>>, vector<8x128xf32>,
    } else {
    }
    %c0 = arith.constant 0 : index
    %c0_1 = arith.constant 0 : index
    %3 = vector.load %arg3[%c0, %c0_1] : memref<8x128xf32, #tpu.memory_space<vmem>>, vector<8x128xf32>
    %c0_2 = arith.constant 0 : index
    %c0_3 = arith.constant 0 : index
    %4 = vector.load %arg5[%c0_2, %c0_3] : memref<128x256xf32, #tpu.memory_space<vmem>>, vector<128x256xf32>
    %cst = arith.constant dense<0.000000e+00> : vector<8x256xf32>
    %5 = tpu.matmul %3, %4, %cst {dimension_numbers = #tpu.dot_dimension_numbers<[1], [0], [0], [1], [0, 0, 1, 1], [], []>} : vector<8x128xf32>, vector<128x256xf32>, vector<8x256xf32> -> vector<8x256xf32>
    %6 = vector.extract_strided_slice %5 {offsets = [0, 0], sizes = [8, 128], strides = [1, 1]} : vector<8x256xf32> to vector<8x128xf32>
    %7 = vector.extract_strided_slice %5 {offsets = [0, 128], sizes = [8, 128], strides = [1, 1]} : vector<8x256xf32> to vector<8x128xf32>
    %c0_4 = arith.constant 0 : index
    %c0_5 = arith.constant 0 : index
    %8 = vector.load %arg7[%c0_4, %c0_5] : memref<8x128xf32, #tpu.memory_space<vmem>>, vector<8x128xf32>
    %cst_6 = arith.constant dense<0.000000e+00> : vector<8x8xf32>
    %9 = tpu.matmul %8, %6, %cst_6 {dimension_numbers = #tpu.dot_dimension_numbers<[1], [1], [0], [0], [0, 0, 1, 0], [], []>} : vector<8x128xf32>, vector<8x128xf32>, vector<8x8xf32> -> vector<8x8xf32>
    %c0_7 = arith.constant 0 : index
    %c0_8 = arith.constant 0 : index
    %10 = vector.load %arg8[%c0_7, %c0_8] : memref<8x1xf32, #tpu.memory_space<vmem>>, vector<8x1xf32>
    %cst_9 = arith.constant dense<0xFF800000> : vector<8xf32>
    %11 = vector.multi_reduction <maximumf>, %9, %cst_9 [1] : vector<8x8xf32> to vector<8xf32>
    %12 = vector.shape_cast %11 : vector<8xf32> to vector<8x1xf32>
    %13 = arith.maximumf %10, %12 : vector<8x1xf32>
    %c0_10 = arith.constant 0 : index
    %c0_11 = arith.constant 0 : index
    %14 = vector.load %arg8[%c0_10, %c0_11] : memref<8x1xf32, #tpu.memory_space<vmem>>, vector<8x1xf32>
    %15 = arith.subf %14, %13 : vector<8x1xf32>
    %16 = math.exp %15 : vector<8x1xf32>
    %17 = vector.broadcast %13 : vector<8x1xf32> to vector<8x8xf32>
    %18 = arith.subf %9, %17 : vector<8x8xf32>
    %19 = math.exp %18 : vector<8x8xf32>
    %c0_12 = arith.constant 0 : index
    %c0_13 = arith.constant 0 : index
    %20 = vector.load %arg9[%c0_12, %c0_13] : memref<8x1xf32, #tpu.memory_space<vmem>>, vector<8x1xf32>
    %21 = arith.mulf %16, %20 : vector<8x1xf32>
    %cst_14 = arith.constant dense<0.000000e+00> : vector<8xf32>
    %22 = vector.multi_reduction <add>, %19, %cst_14 [1] : vector<8x8xf32> to vector<8xf32>
    %23 = vector.shape_cast %22 : vector<8xf32> to vector<8x1xf32>
    %24 = arith.addf %21, %23 : vector<8x1xf32>
    %c0_15 = arith.constant 0 : index
    %c0_16 = arith.constant 0 : index
    %25 = vector.load %arg9[%c0_15, %c0_16] : memref<8x1xf32, #tpu.memory_space<vmem>>, vector<8x1xf32>
    tpu.vector_store %arg9[%c0_15, %c0_16], %24 {strides = array<i32>} : memref<8x1xf32, #tpu.memory_space<vmem>>, vector<8x1xf32>,
    %c0_17 = arith.constant 0 : index
    %c0_18 = arith.constant 0 : index
    %26 = vector.load %arg10[%c0_17, %c0_18] : memref<8x128xf32, #tpu.memory_space<vmem>>, vector<8x128xf32>
    %27 = vector.broadcast %16 : vector<8x1xf32> to vector<8x128xf32>
    %28 = arith.mulf %27, %26 : vector<8x128xf32>
    %cst_19 = arith.constant dense<0.000000e+00> : vector<8x128xf32>
    %29 = tpu.matmul %19, %7, %cst_19 {dimension_numbers = #tpu.dot_dimension_numbers<[1], [0], [0], [1], [0, 0, 1, 1], [], []>} : vector<8x8xf32>, vector<8x128xf32>, vector<8x128xf32> -> vector<8x128xf32>
    %30 = arith.addf %28, %29 : vector<8x128xf32>
    %c0_20 = arith.constant 0 : index
    %c0_21 = arith.constant 0 : index
    %31 = vector.load %arg10[%c0_20, %c0_21] : memref<8x128xf32, #tpu.memory_space<vmem>>, vector<8x128xf32>
    tpu.vector_store %arg10[%c0_20, %c0_21], %30 {strides = array<i32>} : memref<8x128xf32, #tpu.memory_space<vmem>>, vector<8x128xf32>,
    %c0_22 = arith.constant 0 : index
    %c0_23 = arith.constant 0 : index
    %32 = vector.load %arg8[%c0_22, %c0_23] : memref<8x1xf32, #tpu.memory_space<vmem>>, vector<8x1xf32>
    tpu.vector_store %arg8[%c0_22, %c0_23], %13 {strides = array<i32>} : memref<8x1xf32, #tpu.memory_space<vmem>>, vector<8x1xf32>,
    %c0_i32_24 = arith.constant 0 : i32
    %33 = arith.cmpi eq, %arg1, %c0_i32_24 : i32
    %34 = arith.extui %33 : i1 to i32
    %c0_i32_25 = arith.constant 0 : i32
    %35 = arith.cmpi ne, %34, %c0_i32_25 : i32
    scf.if %35 {
      %c0_26 = arith.constant 0 : index
      %c0_27 = arith.constant 0 : index
      %36 = vector.load %arg10[%c0_26, %c0_27] : memref<8x128xf32, #tpu.memory_space<vmem>>, vector<8x128xf32>
      %c0_28 = arith.constant 0 : index
      %c0_29 = arith.constant 0 : index
      %37 = vector.load %arg9[%c0_28, %c0_29] : memref<8x1xf32, #tpu.memory_space<vmem>>, vector<8x1xf32>
      %38 = tpu.reciprocal %37 : vector<8x1xf32> -> vector<8x1xf32>
      %39 = vector.broadcast %38 : vector<8x1xf32> to vector<8x128xf32>
      %40 = arith.mulf %36, %39 : vector<8x128xf32>
      %c0_30 = arith.constant 0 : index
      %c0_31 = arith.constant 0 : index
      %41 = vector.load %arg6[%c0_30, %c0_31] : memref<8x128xf32, #tpu.memory_space<vmem>>, vector<8x128xf32>
      tpu.vector_store %arg6[%c0_30, %c0_31], %40 {strides = array<i32>} : memref<8x128xf32, #tpu.memory_space<vmem>>, vector<8x128xf32>,
    } else {
    }
    return
  }
  func.func @transform_0(%arg0: i32, %arg1: i32) -> (i32, i32) {
    %c0_i32 = arith.constant 0 : i32
    %c0_i32_0 = arith.constant 0 : i32
    return %arg0, %c0_i32 : i32, i32
  }
  func.func @transform_1(%arg0: i32, %arg1: i32) -> (i32, i32) {
    %c0_i32 = arith.constant 0 : i32
    %c0_i32_0 = arith.constant 0 : i32
    return %arg1, %c0_i32 : i32, i32
  }
  func.func @transform_2(%arg0: i32, %arg1: i32) -> (i32, i32) {
    %c0_i32 = arith.constant 0 : i32
    %c0_i32_0 = arith.constant 0 : i32
    %c0_i32_1 = arith.constant 0 : i32
    return %c0_i32, %c0_i32_0 : i32, i32
  }
  func.func @transform_3(%arg0: i32, %arg1: i32) -> (i32, i32) {
    %c0_i32 = arith.constant 0 : i32
    %c0_i32_0 = arith.constant 0 : i32
    %c0_i32_1 = arith.constant 0 : i32
    return %c0_i32, %c0_i32_0 : i32, i32
  }
  func.func @transform_4(%arg0: i32, %arg1: i32) -> (i32, i32) {
    %c0_i32 = arith.constant 0 : i32
    %c0_i32_0 = arith.constant 0 : i32
    return %arg0, %c0_i32 : i32, i32
  }
}

</mosaic_0001>

<llo_original>
// kernel: tpu_custom_call.1
$region0: #{tpu_custom_call.1}
  #allocation0 [shape = 'u32[]', space=smem, size = 0x4, offset = 0x4, fixed_abs, tag = 'smem constant byte address 0x4 - core index']
  #allocation1 [shape = 'u32[144,128]{1,0:T(1,128)}', space=vmem, size = 0x12000, scoped, tag = 'internal scratch']
  #allocation2 [shape = 'f32[8,128]{1,0:T(8,128)}', space=vmem, size = 0x1000, scoped, tag = 'scratch operand']
  #allocation3 [shape = 'f32[8,1]{1,0:T(8,128)}', space=vmem, size = 0x1000, scoped, tag = 'scratch operand']
  #allocation4 [shape = 'f32[8,1]{1,0:T(8,128)}', space=vmem, size = 0x1000, scoped, tag = 'scratch operand']
  #allocation5 [shape = 'f32[8,128]{1,0:T(8,128)}', space=vmem, size = 0x1000, scoped, tag = 'scratch operand']
  %s0 = inlined_call_operand.hbm [shape: f32[8,128], index: 0, kind: input, shape index: {}]
  %s1 = inlined_call_operand.hbm [shape: f32[8,128], index: 1, kind: input, shape index: {}]
  %s2 = inlined_call_operand.hbm [shape: f32[128,128], index: 2, kind: input, shape index: {}]
  %s3 = inlined_call_operand.hbm [shape: f32[128,256], index: 3, kind: input, shape index: {}]
  %s4 = inlined_call_operand.hbm [shape: f32[8,128], index: 4, kind: output, shape index: {}]
  %s5 = sld [smem:[#allocation0]]
  $region50: #{tpu_custom_call.1} parent=0
    _
  %s7 = ssub.s32 1, %s5
  %s8 = scalar_select 0, %s7, %s5
  $region1: #{tpu_custom_call.1} parent=0
    #allocation6 [shape = 'u8[4096]{0}', space=vmem, size = 0x1000, scoped, tag = 'input window, operand 0, single buffered']
    #allocation7 [shape = 's32[1]{0}', space=sflag, size = 0x4, scoped, tag = 'scoped memory for tpu_custom_call.1']
    #allocation8 [shape = 's32[1]{0}', space=sflag, size = 0x4, scoped, tag = 'scoped memory for tpu_custom_call.1']
    #allocation9 [shape = 'u8[4096]{0}', space=vmem, size = 0x1000, scoped, tag = 'input window, operand 1, single buffered']
    #allocation10 [shape = 's32[1]{0}', space=sflag, size = 0x4, scoped, tag = 'scoped memory for tpu_custom_call.1']
    #allocation11 [shape = 'u8[65536]{0}', space=vmem, size = 0x10000, scoped, tag = 'input window, operand 2, single buffered']
    #allocation12 [shape = 'u8[131072]{0}', space=vmem, size = 0x20000, scoped, tag = 'input window, operand 3, single buffered']
    #allocation13 [shape = 's32[1]{0}', space=sflag, size = 0x4, scoped, tag = 'scoped memory for tpu_custom_call.1']
    #allocation14 [shape = 'u8[4096]{0}', space=vmem, size = 0x1000, scoped, tag = 'output window, operand 0, single buffered']
    %9 = vsyncpa [#allocation7], 0
    %10 = vsyncpa [#allocation10], 0
    %11 = vsyncpa [#allocation13], 0
    %12 = vsyncpa [#allocation8], 0
    // Predicated region
    $region2: #{tpu_custom_call.1} parent=1 // pred_check
      _
    $region3: #{tpu_custom_call.1} parent=1 // pred_check_branch
      %14 = sbr.rel (0) target = $region5
    $region4: #{tpu_custom_call.1} parent=1 // pred_region
      %s16 = ssub.s32 128, 128
      %17 = vsyncadd [#allocation7], %s16
      %s19 = sshll.u32 [#allocation6], 4
      %s20 = int_to_ptr.vmem [resolvable:$true] %s19
      %22 = dma.hbm_to_vmem [thread:$0]  %s0, 128, %s20, [#allocation7]
    $region5: #{tpu_custom_call.1} parent=1 // pred_fallthru
      _
    // Predicated region
    $region6: #{tpu_custom_call.1} parent=1 // pred_check
      _
    $region7: #{tpu_custom_call.1} parent=1 // pred_check_branch
      %24 = sbr.rel (0) target = $region9
    $region8: #{tpu_custom_call.1} parent=1 // pred_region
      %s26 = ssub.s32 128, 128
      %27 = vsyncadd [#allocation10], %s26
      %s29 = sshll.u32 [#allocation9], 4
      %s30 = int_to_ptr.vmem [resolvable:$true] %s29
      %32 = dma.hbm_to_vmem [thread:$0]  %s1, 128, %s30, [#allocation10]
    $region9: #{tpu_custom_call.1} parent=1 // pred_fallthru
      _
    // Predicated region
    $region10: #{tpu_custom_call.1} parent=1 // pred_check
      _
    $region11: #{tpu_custom_call.1} parent=1 // pred_check_branch
      %34 = sbr.rel (0) target = $region13
    $region12: #{tpu_custom_call.1} parent=1 // pred_region
      %s36 = ssub.s32 2048, 2048
      %37 = vsyncadd [#allocation10], %s36
      %s38 = sshll.u32 [#allocation11], 4
      %s39 = int_to_ptr.vmem [resolvable:$true] %s38
      %44 = dma.hbm_to_vmem [thread:$0]  %s2, 2048, %s39, [#allocation10], 128, 128, 8
    $region13: #{tpu_custom_call.1} parent=1 // pred_fallthru
      _
    // Predicated region
    $region14: #{tpu_custom_call.1} parent=1 // pred_check
      _
    $region15: #{tpu_custom_call.1} parent=1 // pred_check_branch
      %46 = sbr.rel (0) target = $region17
    $region16: #{tpu_custom_call.1} parent=1 // pred_region
      %s48 = ssub.s32 4096, 4096
      %49 = vsyncadd [#allocation13], %s48
      %s50 = sshll.u32 [#allocation12], 4
      %s51 = int_to_ptr.vmem [resolvable:$true] %s50
      %56 = dma.hbm_to_vmem [thread:$0]  %s3, 4096, %s51, [#allocation13], 256, 256, 16
    $region17: #{tpu_custom_call.1} parent=1 // pred_fallthru
      _
    // Predicated region
    $region18: #{tpu_custom_call.1} parent=1 // pred_check
      _
    $region19: #{tpu_custom_call.1} parent=1 // pred_check_branch
      %58 = sbr.rel (0) target = $region21
    $region20: #{tpu_custom_call.1} parent=1 // pred_region
      %59 = dma.done [#allocation7], 128
    $region21: #{tpu_custom_call.1} parent=1 // pred_fallthru
      _
    // Predicated region
    $region22: #{tpu_custom_call.1} parent=1 // pred_check
      _
    $region23: #{tpu_custom_call.1} parent=1 // pred_check_branch
      %61 = sbr.rel (0) target = $region25
    $region24: #{tpu_custom_call.1} parent=1 // pred_region
      %62 = dma.done [#allocation10], 128
    $region25: #{tpu_custom_call.1} parent=1 // pred_fallthru
      _
    // Predicated region
    $region26: #{tpu_custom_call.1} parent=1 // pred_check
      _
    $region27: #{tpu_custom_call.1} parent=1 // pred_check_branch
      %64 = sbr.rel (0) target = $region29
    $region28: #{tpu_custom_call.1} parent=1 // pred_region
      %65 = dma.done [#allocation10], 2048
    $region29: #{tpu_custom_call.1} parent=1 // pred_fallthru
      _
    // Predicated region
    $region30: #{tpu_custom_call.1} parent=1 // pred_check
      _
    $region31: #{tpu_custom_call.1} parent=1 // pred_check_branch
      %67 = sbr.rel (0) target = $region33
    $region32: #{tpu_custom_call.1} parent=1 // pred_region
      %68 = dma.done [#allocation13], 4096
    $region33: #{tpu_custom_call.1} parent=1 // pred_fallthru
      _
    %p69 = scmp.eq.s32.totalorder 0, 0
    // Predicated region
    $region34: #{tpu_custom_call.1} parent=1 // pred_check
      %p70 = pneg %p69
    $region35: #{tpu_custom_call.1} parent=1 // pred_check_branch
      %72 = sbr.rel (%p70) target = $region37
    $region36: #{tpu_custom_call.1} parent=1 // pred_region
      %v73 = vld [vmem:[#allocation6] sm:$0xff]
      %v74 = vld [vmem:[#allocation11] sm:$0xff]
      %v75 = vld [vmem:[#allocation11 + $0x8] sm:$0xff]
      %v76 = vld [vmem:[#allocation11 + $0x10] sm:$0xff]
      %v77 = vld [vmem:[#allocation11 + $0x18] sm:$0xff]
      %v78 = vld [vmem:[#allocation11 + $0x20] sm:$0xff]
      %v79 = vld [vmem:[#allocation11 + $0x28] sm:$0xff]
      %v80 = vld [vmem:[#allocation11 + $0x30] sm:$0xff]
      %v81 = vld [vmem:[#allocation11 + $0x38] sm:$0xff]
      %v82 = vld [vmem:[#allocation11 + $0x40] sm:$0xff]
      %v83 = vld [vmem:[#allocation11 + $0x48] sm:$0xff]
      %v84 = vld [vmem:[#allocation11 + $0x50] sm:$0xff]
      %v85 = vld [vmem:[#allocation11 + $0x58] sm:$0xff]
      %v86 = vld [vmem:[#allocation11 + $0x60] sm:$0xff]
      %v87 = vld [vmem:[#allocation11 + $0x68] sm:$0xff]
      %v88 = vld [vmem:[#allocation11 + $0x70] sm:$0xff]
      %v89 = vld [vmem:[#allocation11 + $0x78] sm:$0xff]
      %90 = vmatprep.subr.mxu0 0.0
      %91 = vmatpush1.msra.mxu0 %v74
      %92 = vmatprep.subr.mxu0 0.0
      %93 = vmatpush1.msra.mxu0 %v75
      %94 = vmatprep.subr.mxu0 0.0
      %95 = vmatpush1.msra.mxu0 %v76
      %96 = vmatprep.subr.mxu0 0.0
      %97 = vmatpush1.msra.mxu0 %v77
      %98 = vmatprep.subr.mxu0 0.0
      %99 = vmatpush1.msra.mxu0 %v78
      %100 = vmatprep.subr.mxu0 0.0
      %101 = vmatpush1.msra.mxu0 %v79
      %102 = vmatprep.subr.mxu0 0.0
      %103 = vmatpush1.msra.mxu0 %v80
      %104 = vmatprep.subr.mxu0 0.0
      %105 = vmatpush1.msra.mxu0 %v81
      %106 = vmatprep.subr.mxu0 0.0
      %107 = vmatpush1.msra.mxu0 %v82
      %108 = vmatprep.subr.mxu0 0.0
      %109 = vmatpush1.msra.mxu0 %v83
      %110 = vmatprep.subr.mxu0 0.0
      %111 = vmatpush1.msra.mxu0 %v84
      %112 = vmatprep.subr.mxu0 0.0
      %113 = vmatpush1.msra.mxu0 %v85
      %114 = vmatprep.subr.mxu0 0.0
      %115 = vmatpush1.msra.mxu0 %v86
      %116 = vmatprep.subr.mxu0 0.0
      %117 = vmatpush1.msra.mxu0 %v87
      %118 = vmatprep.subr.mxu0 0.0
      %119 = vmatpush1.msra.mxu0 %v88
      %120 = vmatprep.subr.mxu0 0.0
      %121 = vmatpush1.msra.mxu0 %v89
      %122 = vmatprep.subr.mxu0 0.0
      %123 = vmatpush1.msra.mxu0 0.0
      %124 = vmatprep.subr.mxu0 0.0
      %125 = vmatpush1.msra.mxu0 0.0
      %126 = vmatprep.subr.mxu0 0.0
      %127 = vmatpush1.msra.mxu0 0.0
      %128 = vmatprep.subr.mxu0 0.0
      %129 = vmatpush1.msra.mxu0 0.0
      %130 = vmatprep.subr.mxu0 0.0
      %131 = vmatpush1.msra.mxu0 0.0
      %132 = vmatprep.subr.mxu0 0.0
      %133 = vmatpush1.msra.mxu0 0.0
      %134 = vmatprep.subr.mxu0 0.0
      %135 = vmatpush1.msra.mxu0 0.0
      %136 = vmatprep.subr.mxu0 0.0
      %137 = vmatpush1.msra.mxu0 0.0
      %138 = vmatprep.subr.mxu0 0.0
      %139 = vmatpush1.msra.mxu0 0.0
      %140 = vmatprep.subr.mxu0 0.0
      %141 = vmatpush1.msra.mxu0 0.0
      %142 = vmatprep.subr.mxu0 0.0
      %143 = vmatpush1.msra.mxu0 0.0
      %144 = vmatprep.subr.mxu0 0.0
      %145 = vmatpush1.msra.mxu0 0.0
      %146 = vmatprep.subr.mxu0 0.0
      %147 = vmatpush1.msra.mxu0 0.0
      %148 = vmatprep.subr.mxu0 0.0
      %149 = vmatpush1.msra.mxu0 0.0
      %150 = vmatprep.subr.mxu0 0.0
      %151 = vmatpush1.msra.mxu0 0.0
      %152 = vmatprep.subr.mxu0 0.0
      %153 = vmatpush1.msra.mxu0 0.0
      %154 = vmatprep.mubr.f32.mxu0 0.0
      %155 = vmatmul.mubr.f32.gmra.mrb[0].mxu0 %v73
      %v156 = vpop.f32.mrb[0].mxu0
      %v157 = vadd.f32 0.0, %v156
      %v158 = vpop.f32.mrb[0].mxu0
      %159 = vdwg.mxu0
      %160 = vst [vmem:[#allocation2] sm:$0xff] %v157
      %vm161 = vcmask 7168
      %162 = vst.msk [vmem:[#allocation3] sm:$0xff] %vm161, -inf
      %163 = vst.msk [vmem:[#allocation4] sm:$0xff] %vm161, 0.0
      %164 = vst [vmem:[#allocation5] sm:$0xff] 0.0
    $region37: #{tpu_custom_call.1} parent=1 // pred_fallthru
      _
    %v165 = vld [vmem:[#allocation9] sm:$0xff]
    %v166 = vld [vmem:[#allocation12] sm:$0xff]
    %v167 = vld [vmem:[#allocation12 + $0x8] sm:$0xff]
    %v168 = vld [vmem:[#allocation12 + $0x10] sm:$0xff]
    %v169 = vld [vmem:[#allocation12 + $0x18] sm:$0xff]
    %v170 = vld [vmem:[#allocation12 + $0x20] sm:$0xff]
    %v171 = vld [vmem:[#allocation12 + $0x28] sm:$0xff]
    %v172 = vld [vmem:[#allocation12 + $0x30] sm:$0xff]
    %v173 = vld [vmem:[#allocation12 + $0x38] sm:$0xff]
    %v174 = vld [vmem:[#allocation12 + $0x40] sm:$0xff]
    %v175 = vld [vmem:[#allocation12 + $0x48] sm:$0xff]
    %v176 = vld [vmem:[#allocation12 + $0x50] sm:$0xff]
    %v177 = vld [vmem:[#allocation12 + $0x58] sm:$0xff]
    %v178 = vld [vmem:[#allocation12 + $0x60] sm:$0xff]
    %v179 = vld [vmem:[#allocation12 + $0x68] sm:$0xff]
    %v180 = vld [vmem:[#allocation12 + $0x70] sm:$0xff]
    %v181 = vld [vmem:[#allocation12 + $0x78] sm:$0xff]
    %v182 = vld [vmem:[#allocation12 + $0x80] sm:$0xff]
    %v183 = vld [vmem:[#allocation12 + $0x88] sm:$0xff]
    %v184 = vld [vmem:[#allocation12 + $0x90] sm:$0xff]
    %v185 = vld [vmem:[#allocation12 + $0x98] sm:$0xff]
    %v186 = vld [vmem:[#allocation12 + $0xa0] sm:$0xff]
    %v187 = vld [vmem:[#allocation12 + $0xa8] sm:$0xff]
    %v188 = vld [vmem:[#allocation12 + $0xb0] sm:$0xff]
    %v189 = vld [vmem:[#allocation12 + $0xb8] sm:$0xff]
    %v190 = vld [vmem:[#allocation12 + $0xc0] sm:$0xff]
    %v191 = vld [vmem:[#allocation12 + $0xc8] sm:$0xff]
    %v192 = vld [vmem:[#allocation12 + $0xd0] sm:$0xff]
    %v193 = vld [vmem:[#allocation12 + $0xd8] sm:$0xff]
    %v194 = vld [vmem:[#allocation12 + $0xe0] sm:$0xff]
    %v195 = vld [vmem:[#allocation12 + $0xe8] sm:$0xff]
    %v196 = vld [vmem:[#allocation12 + $0xf0] sm:$0xff]
    %v197 = vld [vmem:[#allocation12 + $0xf8] sm:$0xff]
    %198 = vmatprep.subr.mxu0 %v167
    %199 = vmatpush1.msra.mxu0 %v166
    %200 = vmatprep.subr.mxu0 %v169
    %201 = vmatpush1.msra.mxu0 %v168
    %202 = vmatprep.subr.mxu0 %v171
    %203 = vmatpush1.msra.mxu0 %v170
    %204 = vmatprep.subr.mxu0 %v173
    %205 = vmatpush1.msra.mxu0 %v172
    %206 = vmatprep.subr.mxu0 %v175
    %207 = vmatpush1.msra.mxu0 %v174
    %208 = vmatprep.subr.mxu0 %v177
    %209 = vmatpush1.msra.mxu0 %v176
    %210 = vmatprep.subr.mxu0 %v179
    %211 = vmatpush1.msra.mxu0 %v178
    %212 = vmatprep.subr.mxu0 %v181
    %213 = vmatpush1.msra.mxu0 %v180
    %214 = vmatprep.subr.mxu0 %v183
    %215 = vmatpush1.msra.mxu0 %v182
    %216 = vmatprep.subr.mxu0 %v185
    %217 = vmatpush1.msra.mxu0 %v184
    %218 = vmatprep.subr.mxu0 %v187
    %219 = vmatpush1.msra.mxu0 %v186
    %220 = vmatprep.subr.mxu0 %v189
    %221 = vmatpush1.msra.mxu0 %v188
    %222 = vmatprep.subr.mxu0 %v191
    %223 = vmatpush1.msra.mxu0 %v190
    %224 = vmatprep.subr.mxu0 %v193
    %225 = vmatpush1.msra.mxu0 %v192
    %226 = vmatprep.subr.mxu0 %v195
    %227 = vmatpush1.msra.mxu0 %v194
    %228 = vmatprep.subr.mxu0 %v197
    %229 = vmatpush1.msra.mxu0 %v196
    %230 = vmatprep.subr.mxu0 0.0
    %231 = vmatpush1.msra.mxu0 0.0
    %232 = vmatprep.subr.mxu0 0.0
    %233 = vmatpush1.msra.mxu0 0.0
    %234 = vmatprep.subr.mxu0 0.0
    %235 = vmatpush1.msra.mxu0 0.0
    %236 = vmatprep.subr.mxu0 0.0
    %237 = vmatpush1.msra.mxu0 0.0
    %238 = vmatprep.subr.mxu0 0.0
    %239 = vmatpush1.msra.mxu0 0.0
    %240 = vmatprep.subr.mxu0 0.0
    %241 = vmatpush1.msra.mxu0 0.0
    %242 = vmatprep.subr.mxu0 0.0
    %243 = vmatpush1.msra.mxu0 0.0
    %244 = vmatprep.subr.mxu0 0.0
    %245 = vmatpush1.msra.mxu0 0.0
    %246 = vmatprep.subr.mxu0 0.0
    %247 = vmatpush1.msra.mxu0 0.0
    %248 = vmatprep.subr.mxu0 0.0
    %249 = vmatpush1.msra.mxu0 0.0
    %250 = vmatprep.subr.mxu0 0.0
    %251 = vmatpush1.msra.mxu0 0.0
    %252 = vmatprep.subr.mxu0 0.0
    %253 = vmatpush1.msra.mxu0 0.0
    %254 = vmatprep.subr.mxu0 0.0
    %255 = vmatpush1.msra.mxu0 0.0
    %256 = vmatprep.subr.mxu0 0.0
    %257 = vmatpush1.msra.mxu0 0.0
    %258 = vmatprep.subr.mxu0 0.0
    %259 = vmatpush1.msra.mxu0 0.0
    %260 = vmatprep.subr.mxu0 0.0
    %261 = vmatpush1.msra.mxu0 0.0
    %262 = vmatprep.mubr.f32.mxu0 0.0
    %263 = vmatmul.mubr.f32.gmra.mrb[0].mxu0 %v165
    %v264 = vpop.f32.mrb[0].mxu0
    %v265 = vadd.f32 0.0, %v264
    %v266 = vpop.f32.mrb[0].mxu0
    %v267 = vadd.f32 0.0, %v266
    %268 = vdwg.mxu0
    %v269 = vld [vmem:[#allocation2] sm:$0xff]
    %270 = vmatprep.subr.mxu0 0.0
    %271 = vmatpush1.xpose.msra.mxu0 %v265
    %272 = vmatprep.subr.mxu0 0.0
    %273 = vmatpush1.xpose.msra.mxu0 0.0
    %274 = vmatprep.subr.mxu0 0.0
    %275 = vmatpush1.xpose.msra.mxu0 0.0
    %276 = vmatprep.subr.mxu0 0.0
    %277 = vmatpush1.xpose.msra.mxu0 0.0
    %278 = vmatprep.subr.mxu0 0.0
    %279 = vmatpush1.xpose.msra.mxu0 0.0
    %280 = vmatprep.subr.mxu0 0.0
    %281 = vmatpush1.xpose.msra.mxu0 0.0
    %282 = vmatprep.subr.mxu0 0.0
    %283 = vmatpush1.xpose.msra.mxu0 0.0
    %284 = vmatprep.subr.mxu0 0.0
    %285 = vmatpush1.xpose.msra.mxu0 0.0
    %286 = vmatprep.subr.mxu0 0.0
    %287 = vmatpush1.xpose.msra.mxu0 0.0
    %288 = vmatprep.subr.mxu0 0.0
    %289 = vmatpush1.xpose.msra.mxu0 0.0
    %290 = vmatprep.subr.mxu0 0.0
    %291 = vmatpush1.xpose.msra.mxu0 0.0
    %292 = vmatprep.subr.mxu0 0.0
    %293 = vmatpush1.xpose.msra.mxu0 0.0
    %294 = vmatprep.subr.mxu0 0.0
    %295 = vmatpush1.xpose.msra.mxu0 0.0
    %296 = vmatprep.subr.mxu0 0.0
    %297 = vmatpush1.xpose.msra.mxu0 0.0
    %298 = vmatprep.subr.mxu0 0.0
    %299 = vmatpush1.xpose.msra.mxu0 0.0
    %300 = vmatprep.subr.mxu0 0.0
    %301 = vmatpush1.xpose.msra.mxu0 0.0
    %302 = vmatprep.subr.mxu0 0.0
    %303 = vmatpush1.xpose.msra.mxu0 0.0
    %304 = vmatprep.subr.mxu0 0.0
    %305 = vmatpush1.xpose.msra.mxu0 0.0
    %306 = vmatprep.subr.mxu0 0.0
    %307 = vmatpush1.xpose.msra.mxu0 0.0
    %308 = vmatprep.subr.mxu0 0.0
    %309 = vmatpush1.xpose.msra.mxu0 0.0
    %310 = vmatprep.subr.mxu0 0.0
    %311 = vmatpush1.xpose.msra.mxu0 0.0
    %312 = vmatprep.subr.mxu0 0.0
    %313 = vmatpush1.xpose.msra.mxu0 0.0
    %314 = vmatprep.subr.mxu0 0.0
    %315 = vmatpush1.xpose.msra.mxu0 0.0
    %316 = vmatprep.subr.mxu0 0.0
    %317 = vmatpush1.xpose.msra.mxu0 0.0
    %318 = vmatprep.subr.mxu0 0.0
    %319 = vmatpush1.xpose.msra.mxu0 0.0
    %320 = vmatprep.subr.mxu0 0.0
    %321 = vmatpush1.xpose.msra.mxu0 0.0
    %322 = vmatprep.subr.mxu0 0.0
    %323 = vmatpush1.xpose.msra.mxu0 0.0
    %324 = vmatprep.subr.mxu0 0.0
    %325 = vmatpush1.xpose.msra.mxu0 0.0
    %326 = vmatprep.subr.mxu0 0.0
    %327 = vmatpush1.xpose.msra.mxu0 0.0
    %328 = vmatprep.subr.mxu0 0.0
    %329 = vmatpush1.xpose.msra.mxu0 0.0
    %330 = vmatprep.subr.mxu0 0.0
    %331 = vmatpush1.xpose.msra.mxu0 0.0
    %332 = vmatprep.subr.mxu0 0.0
    %333 = vmatpush1.xpose.msra.mxu0 0.0
    %334 = vmatprep.mubr.f32.mxu0 0.0
    %335 = vmatmul.mubr.f32.gmra.mrb[0].mxu0 %v269
    %v336 = vpop.f32.mrb[0].mxu0
    %v337 = vadd.f32 0.0, %v336
    %v338 = vpop.f32.mrb[0].mxu0
    %339 = vdwg.mxu0
    %v340 = vld [vmem:[#allocation3] sm:$0xff]
    %vm341 = vcmask 64512
    %v342 = vsel %vm341, %v337, -inf
    %343 = vmax.xlane.f32.xlu0 %v342
    %v344 = vpop.xlane.xlu0 %343
    %v345 = vmax.f32 %v340, %v344
    %v346 = vsub.f32 %v340, %v345
    %v347 = vmul.f32 %v346, 1.442695
    %v348 = vpow.pop %v347
    %350 = vset.pattern.permute.xlu0 0
    %351 = vperm.xlu0 %350, %v345
    %v352 = vpop.permute.xlu0 %351
    %v354 = vsub.f32 %v337, %v352
    %v355 = vmul.f32 %v354, 1.442695
    %v356 = vpow.pop %v355
    %v357 = vld [vmem:[#allocation4] sm:$0xff]
    %v358 = vmul.f32 %v348, %v357
    %v359 = vsel %vm341, %v356, 0.0
    %360 = vadd.xlane.f32.xlu0 %v359
    %v361 = vpop.xlane.xlu0 %360
    %v362 = vadd.f32 %v358, %v361
    %vm363 = vcmask 7168
    %364 = vst.msk [vmem:[#allocation4] sm:$0xff] %vm363, %v362
    %v365 = vld [vmem:[#allocation5] sm:$0xff]
    %367 = vset.pattern.permute.xlu0 0
    %368 = vperm.xlu0 %367, %v348
    %v369 = vpop.permute.xlu0 %368
    %v371 = vmul.f32 %v369, %v365
    %v373 = vsel %vm341, %v356, 0
    %375 = vmatprep.subr.mxu0 0.0
    %376 = vmatpush1.msra.mxu0 %v267
    %377 = vmatprep.subr.mxu0 0.0
    %378 = vmatpush1.msra.mxu0 0.0
    %379 = vmatprep.subr.mxu0 0.0
    %380 = vmatpush1.msra.mxu0 0.0
    %381 = vmatprep.subr.mxu0 0.0
    %382 = vmatpush1.msra.mxu0 0.0
    %383 = vmatprep.subr.mxu0 0.0
    %384 = vmatpush1.msra.mxu0 0.0
    %385 = vmatprep.subr.mxu0 0.0
    %386 = vmatpush1.msra.mxu0 0.0
    %387 = vmatprep.subr.mxu0 0.0
    %388 = vmatpush1.msra.mxu0 0.0
    %389 = vmatprep.subr.mxu0 0.0
    %390 = vmatpush1.msra.mxu0 0.0
    %391 = vmatprep.subr.mxu0 0.0
    %392 = vmatpush1.msra.mxu0 0.0
    %393 = vmatprep.subr.mxu0 0.0
    %394 = vmatpush1.msra.mxu0 0.0
    %395 = vmatprep.subr.mxu0 0.0
    %396 = vmatpush1.msra.mxu0 0.0
    %397 = vmatprep.subr.mxu0 0.0
    %398 = vmatpush1.msra.mxu0 0.0
    %399 = vmatprep.subr.mxu0 0.0
    %400 = vmatpush1.msra.mxu0 0.0
    %401 = vmatprep.subr.mxu0 0.0
    %402 = vmatpush1.msra.mxu0 0.0
    %403 = vmatprep.subr.mxu0 0.0
    %404 = vmatpush1.msra.mxu0 0.0
    %405 = vmatprep.subr.mxu0 0.0
    %406 = vmatpush1.msra.mxu0 0.0
    %407 = vmatprep.subr.mxu0 0.0
    %408 = vmatpush1.msra.mxu0 0.0
    %409 = vmatprep.subr.mxu0 0.0
    %410 = vmatpush1.msra.mxu0 0.0
    %411 = vmatprep.subr.mxu0 0.0
    %412 = vmatpush1.msra.mxu0 0.0
    %413 = vmatprep.subr.mxu0 0.0
    %414 = vmatpush1.msra.mxu0 0.0
    %415 = vmatprep.subr.mxu0 0.0
    %416 = vmatpush1.msra.mxu0 0.0
    %417 = vmatprep.subr.mxu0 0.0
    %418 = vmatpush1.msra.mxu0 0.0
    %419 = vmatprep.subr.mxu0 0.0
    %420 = vmatpush1.msra.mxu0 0.0
    %421 = vmatprep.subr.mxu0 0.0
    %422 = vmatpush1.msra.mxu0 0.0
    %423 = vmatprep.subr.mxu0 0.0
    %424 = vmatpush1.msra.mxu0 0.0
    %425 = vmatprep.subr.mxu0 0.0
    %426 = vmatpush1.msra.mxu0 0.0
    %427 = vmatprep.subr.mxu0 0.0
    %428 = vmatpush1.msra.mxu0 0.0
    %429 = vmatprep.subr.mxu0 0.0
    %430 = vmatpush1.msra.mxu0 0.0
    %431 = vmatprep.subr.mxu0 0.0
    %432 = vmatpush1.msra.mxu0 0.0
    %433 = vmatprep.subr.mxu0 0.0
    %434 = vmatpush1.msra.mxu0 0.0
    %435 = vmatprep.subr.mxu0 0.0
    %436 = vmatpush1.msra.mxu0 0.0
    %437 = vmatprep.subr.mxu0 0.0
    %438 = vmatpush1.msra.mxu0 0.0
    %439 = vmatprep.mubr.f32.mxu0 0.0
    %440 = vmatmul.mubr.f32.gmra.mrb[0].mxu0 %v373
    %v441 = vpop.f32.mrb[0].mxu0
    %v442 = vadd.f32 0.0, %v441
    %v443 = vpop.f32.mrb[0].mxu0
    %444 = vdwg.mxu0
    %v445 = vadd.f32 %v371, %v442
    %446 = vst [vmem:[#allocation5] sm:$0xff] %v445
    %447 = vst.msk [vmem:[#allocation3] sm:$0xff] %vm363, %v345
    // Predicated region
    $region38: #{tpu_custom_call.1} parent=1 // pred_check
      %p448 = pneg %p69
    $region39: #{tpu_custom_call.1} parent=1 // pred_check_branch
      %450 = sbr.rel (%p448) target = $region41
    $region40: #{tpu_custom_call.1} parent=1 // pred_region
      %v451 = vld [vmem:[#allocation5] sm:$0xff]
      %v452 = vld [vmem:[#allocation4] sm:$0xff]
      %v453 = vrcp.pop %v452
      %455 = vset.pattern.permute.xlu0 0
      %456 = vperm.xlu0 %455, %v453
      %v457 = vpop.permute.xlu0 %456
      %v459 = vmul.f32 %v451, %v457
      %460 = vst [vmem:[#allocation14] sm:$0xff] %v459
    $region41: #{tpu_custom_call.1} parent=1 // pred_fallthru
      _
    // Predicated region
    $region42: #{tpu_custom_call.1} parent=1 // pred_check
      _
    $region43: #{tpu_custom_call.1} parent=1 // pred_check_branch
      %462 = sbr.rel (0) target = $region45
    $region44: #{tpu_custom_call.1} parent=1 // pred_region
      %s464 = ssub.s32 128, 128
      %465 = vsyncadd [#allocation8], %s464
      %s467 = sshll.u32 [#allocation14], 4
      %s468 = int_to_ptr.vmem [resolvable:$true] %s467
      %470 = dma.vmem_to_hbm [thread:$0]  %s468, 128, %s4, [#allocation8]
    $region45: #{tpu_custom_call.1} parent=1 // pred_fallthru
      _
    // Predicated region
    $region46: #{tpu_custom_call.1} parent=1 // pred_check
      _
    $region47: #{tpu_custom_call.1} parent=1 // pred_check_branch
      %472 = sbr.rel (0) target = $region49
    $region48: #{tpu_custom_call.1} parent=1 // pred_region
      %473 = dma.done [#allocation8], 128
    $region49: #{tpu_custom_call.1} parent=1 // pred_fallthru
      _
    %474 = vsyncpa [#allocation7], 1
    %475 = vsyncpa [#allocation10], 1
    %476 = vsyncpa [#allocation13], 1
    %477 = vsyncpa [#allocation8], 1

</llo_original>
